<compile_context>
chip_gen: v7x
topology: tpu7x:2x2x1
jax: 0.10.0
libtpu: 0.0.40
codegen_flags: <defaults>
</compile_context>

<pallas_src>
import math

import jax
import jax.numpy as jnp
from jax.experimental import pallas as pl
from jax.experimental.pallas import tpu as pltpu

SMOOTH_NR = 1e-5  # MONAI DiceLoss defaults (smooth_nr / smooth_dr)
SMOOTH_DR = 1e-5

_PAD_LOGIT = -1e4  # finite: sigmoid -> 0, softplus -> 0, so padding contributes exactly 0


def _bce_dice_partial_kernel(p_ref, y_ref, inter_ref, pred_ref, gt_ref, bce_ref):
    p = p_ref[...].astype(jnp.float32)   # (rows_tile, 128) logits
    y = y_ref[...].astype(jnp.float32)   # (rows_tile, 128) binary targets

    # One exponential shared between sigmoid and the BCE softplus term.
    e = jnp.exp(-jnp.abs(p))
    inv = 1.0 / (1.0 + e)
    s = jnp.where(p >= 0.0, inv, e * inv)                       # sigmoid(p)
    bce_el = jnp.maximum(p, 0.0) - p * y + jnp.log1p(e)          # stable BCE-with-logits

    inter_ref[...] = jnp.sum(s * y).reshape(1, 1, 1)
    pred_ref[...] = jnp.sum(s).reshape(1, 1, 1)
    gt_ref[...] = jnp.sum(y).reshape(1, 1, 1)
    bce_ref[...] = jnp.sum(bce_el).reshape(1, 1, 1)


def bce_dice_loss(p, y, *, target_rows=2048):
    """p: logits (B, 3, *spatial); y: binary targets (B, 3, *spatial). Returns scalar."""
    B, C = int(p.shape[0]), int(p.shape[1])
    assert C == 3, "BCEDiceLoss expects 3 channels (WT, TC, ET)"
    assert p.shape == y.shape
    hw = math.prod(int(d) for d in p.shape[2:])
    n_per_channel = B * hw                       # BCEWithLogitsLoss 'mean' denominator

    # Tiling: per-channel lane-rows of 128, tiled in (rows_tile, 128) blocks.
    target_rows = max(8, (int(target_rows) // 8) * 8)
    rows_needed = pl.cdiv(hw, 128)
    t = pl.cdiv(rows_needed, target_rows)                    # tiles per (b, c) channel
    rows_tile = ((pl.cdiv(rows_needed, t) + 7) // 8) * 8     # multiple of 8 sublanes
    rows_pc = t * rows_tile
    hw_pad = rows_pc * 128

    # Free reshapes; pad (copy) only when the spatial size is not tile-aligned.
    p2 = p.reshape(B * C, hw)
    y2 = y.reshape(B * C, hw)
    pad = hw_pad - hw
    if pad:
        p2 = jnp.pad(p2, ((0, 0), (0, pad)), constant_values=_PAD_LOGIT)
        y2 = jnp.pad(y2, ((0, 0), (0, pad)), constant_values=0)
    p2 = p2.reshape(B * C * rows_pc, 128)
    y2 = y2.reshape(B * C * rows_pc, 128)

    n_blocks = B * C * t
    in_spec = pl.BlockSpec((rows_tile, 128),
                           lambda b, c, ti: ((b * C + c) * t + ti, 0))
    part_shape = jax.ShapeDtypeStruct((n_blocks, 1, 1), jnp.float32)
    part_spec = pl.BlockSpec((1, 1, 1),
                             lambda b, c, ti: ((b * C + c) * t + ti, 0, 0))

    total_elems = B * C * hw_pad
    bytes_in = p2.size * p2.dtype.itemsize + y2.size * y2.dtype.itemsize
    cost = pl.CostEstimate(
        flops=14 * total_elems,
        transcendentals=3 * total_elems,
        bytes_accessed=bytes_in + 4 * n_blocks * 4,
    )

    inter, pred_o, gt_o, bce_sum = pl.pallas_call(
        _bce_dice_partial_kernel,
        out_shape=(part_shape, part_shape, part_shape, part_shape),
        grid=(B, C, t),
        in_specs=[in_spec, in_spec],
        out_specs=(part_spec, part_spec, part_spec, part_spec),
        compiler_params=pltpu.CompilerParams(
            dimension_semantics=("parallel", "parallel", "parallel"),
            vmem_limit_bytes=32 * 1024 * 1024,
        ),
        cost_estimate=cost,
    )(p2, y2)

    # Tiny epilogue in XLA: combine per-tile partials into per-channel dice + bce.
    def per_channel(x):
        return x.reshape(B, C, t).sum(axis=(0, 2))           # (C,)

    inter_c = per_channel(inter)
    pred_c = per_channel(pred_o)
    gt_c = per_channel(gt_o)
    bce_c = per_channel(bce_sum) / jnp.float32(n_per_channel)

    dice_c = 1.0 - (2.0 * inter_c + SMOOTH_NR) / (pred_c + gt_c + SMOOTH_DR)
    return jnp.sum(dice_c + bce_c)


def _reference(p, y):
    """Pure-JAX reference matching the PyTorch module semantics."""
    total = 0.0
    for c in range(3):
        pc = p[:, c].astype(jnp.float32)
        yc = y[:, c].astype(jnp.float32)
        s = jax.nn.sigmoid(pc)
        inter = jnp.sum(s * yc)
        dice = 1.0 - (2.0 * inter + SMOOTH_NR) / (jnp.sum(s) + jnp.sum(yc) + SMOOTH_DR)
        bce = jnp.mean(jnp.maximum(pc, 0.0) - pc * yc + jnp.log1p(jnp.exp(-jnp.abs(pc))))
        total = total + dice + bce
    return total


if __name__ == "__main__":
    key = jax.random.PRNGKey(0)
    kp, ky = jax.random.split(key)
    B, C, H, W = 2, 3, 16, 16
    p = jax.random.normal(kp, (B, C, H, W), dtype=jnp.float32)
    y = jax.random.bernoulli(ky, 0.4, (B, C, H, W)).astype(jnp.float32)

    loss = jax.block_until_ready(bce_dice_loss(p, y))
    ref = jax.block_until_ready(_reference(p, y))
    assert jnp.allclose(loss, ref, rtol=1e-5, atol=1e-5), (loss, ref)

    print("KERNEL_OK")
</pallas_src>

<mosaic_0001>
module attributes {stable_mosaic.version = 11 : i64} {
  func.func @_bce_dice_partial_kernel(%arg0: i32, %arg1: i32, %arg2: i32, %arg3: memref<8x128xf32, #tpu.memory_space<vmem>>, %arg4: memref<8x128xf32, #tpu.memory_space<vmem>>, %arg5: memref<1x1x1xf32, #tpu.memory_space<vmem>>, %arg6: memref<1x1x1xf32, #tpu.memory_space<vmem>>, %arg7: memref<1x1x1xf32, #tpu.memory_space<vmem>>, %arg8: memref<1x1x1xf32, #tpu.memory_space<vmem>>) attributes {dimension_semantics = [#tpu.dimension_semantics<parallel>, #tpu.dimension_semantics<parallel>, #tpu.dimension_semantics<parallel>], iteration_bounds = array<i64: 2, 3, 1>, scalar_prefetch = 0 : i64, scratch_operands = 0 : i64, tpu.core_type = #tpu.core_type<tc>, window_params = [{transform_indices = @transform_0, window_bounds = array<i64: 8, 128>}, {transform_indices = @transform_1, window_bounds = array<i64: 8, 128>}, {transform_indices = @transform_2, window_bounds = array<i64: 1, 1, 1>}, {transform_indices = @transform_3, window_bounds = array<i64: 1, 1, 1>}, {transform_indices = @transform_4, window_bounds = array<i64: 1, 1, 1>}, {transform_indices = @transform_5, window_bounds = array<i64: 1, 1, 1>}]} {
    %c0 = arith.constant 0 : index
    %c0_0 = arith.constant 0 : index
    %0 = vector.load %arg3[%c0, %c0_0] : memref<8x128xf32, #tpu.memory_space<vmem>>, vector<8x128xf32>
    %c0_1 = arith.constant 0 : index
    %c0_2 = arith.constant 0 : index
    %1 = vector.load %arg4[%c0_1, %c0_2] : memref<8x128xf32, #tpu.memory_space<vmem>>, vector<8x128xf32>
    %2 = math.absf %0 : vector<8x128xf32>
    %cst = arith.constant 0.000000e+00 : f32
    %3 = vector.broadcast %cst : f32 to vector<8x128xf32>
    %4 = arith.subf %3, %2 : vector<8x128xf32>
    %5 = math.exp %4 : vector<8x128xf32>
    %cst_3 = arith.constant 1.000000e+00 : f32
    %6 = vector.broadcast %cst_3 : f32 to vector<8x128xf32>
    %7 = arith.addf %6, %5 : vector<8x128xf32>
    %cst_4 = arith.constant 1.000000e+00 : f32
    %8 = vector.broadcast %cst_4 : f32 to vector<8x128xf32>
    %9 = arith.divf %8, %7 : vector<8x128xf32>
    %cst_5 = arith.constant 0.000000e+00 : f32
    %10 = vector.broadcast %cst_5 : f32 to vector<8x128xf32>
    %11 = arith.cmpf oge, %0, %10 : vector<8x128xf32>
    %12 = arith.mulf %5, %9 : vector<8x128xf32>
    %13 = arith.select %11, %9, %12 : vector<8x128xi1>, vector<8x128xf32>
    %cst_6 = arith.constant 0.000000e+00 : f32
    %14 = vector.broadcast %cst_6 : f32 to vector<8x128xf32>
    %15 = arith.maximumf %0, %14 : vector<8x128xf32>
    %16 = arith.mulf %0, %1 : vector<8x128xf32>
    %17 = arith.subf %15, %16 : vector<8x128xf32>
    %18 = math.log1p %5 : vector<8x128xf32>
    %19 = arith.addf %17, %18 : vector<8x128xf32>
    %20 = arith.mulf %13, %1 : vector<8x128xf32>
    %21 = vector.shape_cast %20 : vector<8x128xf32> to vector<1x8x128xf32>
    %cst_7 = arith.constant dense<0.000000e+00> : vector<1xf32>
    %22 = vector.multi_reduction <add>, %21, %cst_7 [1, 2] : vector<1x8x128xf32> to vector<1xf32>
    %23 = vector.shape_cast %22 : vector<1xf32> to vector<1x1x1xf32>
    %24 = vector.extract %23[0, 0, 0] : f32 from vector<1x1x1xf32>
    %25 = vector.broadcast %24 : f32 to vector<1x1x1xf32>
    %c0_8 = arith.constant 0 : index
    %c0_9 = arith.constant 0 : index
    %c0_10 = arith.constant 0 : index
    %26 = vector.load %arg5[%c0_8, %c0_9, %c0_10] : memref<1x1x1xf32, #tpu.memory_space<vmem>>, vector<1x1x1xf32>
    tpu.vector_store %arg5[%c0_8, %c0_9, %c0_10], %25 {strides = array<i32>} : memref<1x1x1xf32, #tpu.memory_space<vmem>>, vector<1x1x1xf32>,
    %27 = vector.shape_cast %13 : vector<8x128xf32> to vector<1x8x128xf32>
    %cst_11 = arith.constant dense<0.000000e+00> : vector<1xf32>
    %28 = vector.multi_reduction <add>, %27, %cst_11 [1, 2] : vector<1x8x128xf32> to vector<1xf32>
    %29 = vector.shape_cast %28 : vector<1xf32> to vector<1x1x1xf32>
    %30 = vector.extract %29[0, 0, 0] : f32 from vector<1x1x1xf32>
    %31 = vector.broadcast %30 : f32 to vector<1x1x1xf32>
    %c0_12 = arith.constant 0 : index
    %c0_13 = arith.constant 0 : index
    %c0_14 = arith.constant 0 : index
    %32 = vector.load %arg6[%c0_12, %c0_13, %c0_14] : memref<1x1x1xf32, #tpu.memory_space<vmem>>, vector<1x1x1xf32>
    tpu.vector_store %arg6[%c0_12, %c0_13, %c0_14], %31 {strides = array<i32>} : memref<1x1x1xf32, #tpu.memory_space<vmem>>, vector<1x1x1xf32>,
    %33 = vector.shape_cast %1 : vector<8x128xf32> to vector<1x8x128xf32>
    %cst_15 = arith.constant dense<0.000000e+00> : vector<1xf32>
    %34 = vector.multi_reduction <add>, %33, %cst_15 [1, 2] : vector<1x8x128xf32> to vector<1xf32>
    %35 = vector.shape_cast %34 : vector<1xf32> to vector<1x1x1xf32>
    %36 = vector.extract %35[0, 0, 0] : f32 from vector<1x1x1xf32>
    %37 = vector.broadcast %36 : f32 to vector<1x1x1xf32>
    %c0_16 = arith.constant 0 : index
    %c0_17 = arith.constant 0 : index
    %c0_18 = arith.constant 0 : index
    %38 = vector.load %arg7[%c0_16, %c0_17, %c0_18] : memref<1x1x1xf32, #tpu.memory_space<vmem>>, vector<1x1x1xf32>
    tpu.vector_store %arg7[%c0_16, %c0_17, %c0_18], %37 {strides = array<i32>} : memref<1x1x1xf32, #tpu.memory_space<vmem>>, vector<1x1x1xf32>,
    %39 = vector.shape_cast %19 : vector<8x128xf32> to vector<1x8x128xf32>
    %cst_19 = arith.constant dense<0.000000e+00> : vector<1xf32>
    %40 = vector.multi_reduction <add>, %39, %cst_19 [1, 2] : vector<1x8x128xf32> to vector<1xf32>
    %41 = vector.shape_cast %40 : vector<1xf32> to vector<1x1x1xf32>
    %42 = vector.extract %41[0, 0, 0] : f32 from vector<1x1x1xf32>
    %43 = vector.broadcast %42 : f32 to vector<1x1x1xf32>
    %c0_20 = arith.constant 0 : index
    %c0_21 = arith.constant 0 : index
    %c0_22 = arith.constant 0 : index
    %44 = vector.load %arg8[%c0_20, %c0_21, %c0_22] : memref<1x1x1xf32, #tpu.memory_space<vmem>>, vector<1x1x1xf32>
    tpu.vector_store %arg8[%c0_20, %c0_21, %c0_22], %43 {strides = array<i32>} : memref<1x1x1xf32, #tpu.memory_space<vmem>>, vector<1x1x1xf32>,
    return
  }
  func.func @transform_0(%arg0: i32, %arg1: i32, %arg2: i32) -> (i32, i32) {
    %c3_i32 = arith.constant 3 : i32
    %0 = arith.muli %arg0, %c3_i32 : i32
    %1 = arith.addi %0, %arg1 : i32
    %c1_i32 = arith.constant 1 : i32
    %2 = arith.muli %1, %c1_i32 : i32
    %3 = arith.addi %2, %arg2 : i32
    %c0_i32 = arith.constant 0 : i32
    %c0_i32_0 = arith.constant 0 : i32
    return %3, %c0_i32 : i32, i32
  }
  func.func @transform_1(%arg0: i32, %arg1: i32, %arg2: i32) -> (i32, i32) {
    %c3_i32 = arith.constant 3 : i32
    %0 = arith.muli %arg0, %c3_i32 : i32
    %1 = arith.addi %0, %arg1 : i32
    %c1_i32 = arith.constant 1 : i32
    %2 = arith.muli %1, %c1_i32 : i32
    %3 = arith.addi %2, %arg2 : i32
    %c0_i32 = arith.constant 0 : i32
    %c0_i32_0 = arith.constant 0 : i32
    return %3, %c0_i32 : i32, i32
  }
  func.func @transform_2(%arg0: i32, %arg1: i32, %arg2: i32) -> (i32, i32, i32) {
    %c3_i32 = arith.constant 3 : i32
    %0 = arith.muli %arg0, %c3_i32 : i32
    %1 = arith.addi %0, %arg1 : i32
    %c1_i32 = arith.constant 1 : i32
    %2 = arith.muli %1, %c1_i32 : i32
    %3 = arith.addi %2, %arg2 : i32
    %c0_i32 = arith.constant 0 : i32
    %c0_i32_0 = arith.constant 0 : i32
    %c0_i32_1 = arith.constant 0 : i32
    return %3, %c0_i32, %c0_i32_0 : i32, i32, i32
  }
  func.func @transform_3(%arg0: i32, %arg1: i32, %arg2: i32) -> (i32, i32, i32) {
    %c3_i32 = arith.constant 3 : i32
    %0 = arith.muli %arg0, %c3_i32 : i32
    %1 = arith.addi %0, %arg1 : i32
    %c1_i32 = arith.constant 1 : i32
    %2 = arith.muli %1, %c1_i32 : i32
    %3 = arith.addi %2, %arg2 : i32
    %c0_i32 = arith.constant 0 : i32
    %c0_i32_0 = arith.constant 0 : i32
    %c0_i32_1 = arith.constant 0 : i32
    return %3, %c0_i32, %c0_i32_0 : i32, i32, i32
  }
  func.func @transform_4(%arg0: i32, %arg1: i32, %arg2: i32) -> (i32, i32, i32) {
    %c3_i32 = arith.constant 3 : i32
    %0 = arith.muli %arg0, %c3_i32 : i32
    %1 = arith.addi %0, %arg1 : i32
    %c1_i32 = arith.constant 1 : i32
    %2 = arith.muli %1, %c1_i32 : i32
    %3 = arith.addi %2, %arg2 : i32
    %c0_i32 = arith.constant 0 : i32
    %c0_i32_0 = arith.constant 0 : i32
    %c0_i32_1 = arith.constant 0 : i32
    return %3, %c0_i32, %c0_i32_0 : i32, i32, i32
  }
  func.func @transform_5(%arg0: i32, %arg1: i32, %arg2: i32) -> (i32, i32, i32) {
    %c3_i32 = arith.constant 3 : i32
    %0 = arith.muli %arg0, %c3_i32 : i32
    %1 = arith.addi %0, %arg1 : i32
    %c1_i32 = arith.constant 1 : i32
    %2 = arith.muli %1, %c1_i32 : i32
    %3 = arith.addi %2, %arg2 : i32
    %c0_i32 = arith.constant 0 : i32
    %c0_i32_0 = arith.constant 0 : i32
    %c0_i32_1 = arith.constant 0 : i32
    return %3, %c0_i32, %c0_i32_0 : i32, i32, i32
  }
}

</mosaic_0001>

<llo_original>
// kernel: tpu_custom_call.1
$region0: #{tpu_custom_call.1}
  #allocation0 [shape = 'u32[]', space=smem, size = 0x4, offset = 0x4, fixed_abs, tag = 'smem constant byte address 0x4 - core index']
  #allocation1 [shape = 'u32[144,128]{1,0:T(1,128)}', space=vmem, size = 0x12000, scoped, tag = 'internal scratch']
  %s0 = inlined_call_operand.hbm [shape: f32[48,128], index: 0, kind: input, shape index: {}]
  %s1 = inlined_call_operand.hbm [shape: f32[48,128], index: 1, kind: input, shape index: {}]
  %s2 = inlined_call_operand.vmem [shape: f32[6,1,1], index: 2, kind: output, shape index: {0}]
  %s3 = inlined_call_operand.vmem [shape: f32[6,1,1], index: 3, kind: output, shape index: {1}]
  %s4 = inlined_call_operand.vmem [shape: f32[6,1,1], index: 4, kind: output, shape index: {2}]
  %s5 = inlined_call_operand.vmem [shape: f32[6,1,1], index: 5, kind: output, shape index: {3}]
  %6 = xla_tuple %s2, %s3, %s4, %s5
  %s7 = sld [smem:[#allocation0]]
  $region73: #{tpu_custom_call.1} parent=0
    _
  %s9 = ssub.s32 1, %s7
  %s10 = scalar_select 0, %s9, %s7
  $region1: #{tpu_custom_call.1} parent=0
    #allocation2 [shape = 'u8[8192]{0}', space=vmem, size = 0x2000, scoped, tag = 'input window, operand 0']
    #allocation3 [shape = 's32[2]{0}', space=sflag, size = 0x8, scoped, tag = 'scoped memory for tpu_custom_call.1']
    #allocation4 [shape = 'u8[8192]{0}', space=vmem, size = 0x2000, scoped, tag = 'input window, operand 1']
    #allocation5 [shape = 's32[2]{0}', space=sflag, size = 0x8, scoped, tag = 'scoped memory for tpu_custom_call.1']
    %11 = vsyncpa [#allocation3], 0
    %s12 = scalar_lea.sflag [#allocation3], 1
    %13 = vsyncpa %s12, 0
    %14 = vsyncpa [#allocation5], 0
    %s15 = scalar_lea.sflag [#allocation5], 1
    %16 = vsyncpa %s15, 0
    loop: start=0, step=1, limit=8
    $region2: #{tpu_custom_call.1} parent=1 // loop_pre_header
      _
    $region3: #{tpu_custom_call.1} parent=1 // loop_header
      %s18 = sphi 0, %s22
      %p19 = scmp.ge.s32.totalorder %s18, 8
      %s25 = sphi 0, %s44
      %s26 = sphi 0, %s40
      %s27 = sphi 0, %s36
      %s28 = sphi 0, %s25
      %s29 = sphi 0, %s26
      %s30 = sphi 0, %s27
      %s31 = sphi 0, %s28
      %s32 = sphi 0, %s29
      %s33 = sphi 0, %s30
      %s53 = sphi 0, %s55
      %s56 = sphi 0, %s53
      %s57 = sphi 0, %s56
      %s73 = sphi 0, %s57
      %s85 = sphi 0, %s87
      %s88 = sphi 0, %s85
      %s89 = sphi 0, %s88
      %s105 = sphi 0, %s89
      %s117 = sphi 0, %s119
      %s120 = sphi 0, %s117
      %s121 = sphi 0, %s120
      %s137 = sphi 0, %s121
      %s149 = sphi 0, %s151
      %s152 = sphi 0, %s149
      %s153 = sphi 0, %s152
      %s169 = sphi 0, %s153
      %s181 = sphi 0, %s183
      %s184 = sphi 0, %s181
      %s185 = sphi 0, %s184
      %s201 = sphi 0, %s185
      %s213 = sphi 0, %s215
      %s216 = sphi 0, %s213
      %s217 = sphi 0, %s216
      %s233 = sphi 0, %s217
    $region4: #{tpu_custom_call.1} parent=1 // loop_header_branch
      %21 = sbr.rel (%p19) target = $region8
    $region5: #{tpu_custom_call.1} parent=1 // loop_body
      %s23 = ssub.s32 %s18, 1
      %s24 = ssub.s32 %s18, 2
      %s34 = sadd.s32 1, %s27
      %p35 = scmp.ge.s32.totalorder %s34, 1
      %s36 = scalar_select %p35, 0, %s34
      %s37 = sadd.s32 1, %s26
      %s38 = scalar_select %p35, %s37, %s26
      %p39 = scmp.ge.s32.totalorder %s38, 3
      %s40 = scalar_select %p39, 0, %s38
      %s41 = sadd.s32 1, %s25
      %s42 = scalar_select %p39, %s41, %s25
      %p43 = scmp.ge.s32.totalorder %s42, 2
      %s44 = scalar_select %p43, 0, %s42
      %s45 = smul.u32 %s25, 3
      %s46 = sadd.s32 %s45, %s26
      %s47 = sadd.s32 %s46, %s27
      %s48 = smul.u32 %s44, 3
      %s49 = sadd.s32 %s48, %s40
      %s50 = sadd.s32 %s49, %s36
      %s51 = ssub.s32 %s47, %s50
      %p52 = scmp.eq.s32.totalorder %s51, 0
      %s54 = sadd.s32 %s53, 1
      %s55 = scalar_select %p52, %s53, %s54
      %p58 = pneg %p52
      %p59 = scmp.eq.s32.totalorder %s18, 5
      %p60 = por %p58, %p59
      %p61 = scmp.ne.s32.totalorder %s53, %s56
      %p62 = scmp.eq.s32.totalorder %s18, 0
      %p63 = por %p61, %p62
      %p64 = scmp.ne.s32.totalorder %s53, %s56
      %p65 = scmp.eq.s32.totalorder %s23, 5
      %p66 = por %p64, %p65
      %p67 = scmp.ne.s32.totalorder %s56, %s57
      %p68 = scmp.eq.s32.totalorder %s23, 0
      %p69 = por %p67, %p68
      %p70 = scmp.ne.s32.totalorder %s56, %s57
      %p71 = scmp.eq.s32.totalorder %s24, 5
      %p72 = por %p70, %p71
      %p74 = scmp.ne.s32.totalorder %s57, %s73
      %p75 = scmp.eq.s32.totalorder %s24, 0
      %p76 = por %p74, %p75
      %s77 = smul.u32 %s25, 3
      %s78 = sadd.s32 %s77, %s26
      %s79 = sadd.s32 %s78, %s27
      %s80 = smul.u32 %s44, 3
      %s81 = sadd.s32 %s80, %s40
      %s82 = sadd.s32 %s81, %s36
      %s83 = ssub.s32 %s79, %s82
      %p84 = scmp.eq.s32.totalorder %s83, 0
      %s86 = sadd.s32 %s85, 1
      %s87 = scalar_select %p84, %s85, %s86
      %p90 = pneg %p84
      %p91 = scmp.eq.s32.totalorder %s18, 5
      %p92 = por %p90, %p91
      %p93 = scmp.ne.s32.totalorder %s85, %s88
      %p94 = scmp.eq.s32.totalorder %s18, 0
      %p95 = por %p93, %p94
      %p96 = scmp.ne.s32.totalorder %s85, %s88
      %p97 = scmp.eq.s32.totalorder %s23, 5
      %p98 = por %p96, %p97
      %p99 = scmp.ne.s32.totalorder %s88, %s89
      %p100 = scmp.eq.s32.totalorder %s23, 0
      %p101 = por %p99, %p100
      %p102 = scmp.ne.s32.totalorder %s88, %s89
      %p103 = scmp.eq.s32.totalorder %s24, 5
      %p104 = por %p102, %p103
      %p106 = scmp.ne.s32.totalorder %s89, %s105
      %p107 = scmp.eq.s32.totalorder %s24, 0
      %p108 = por %p106, %p107
      %s109 = smul.u32 %s25, 3
      %s110 = sadd.s32 %s109, %s26
      %s111 = sadd.s32 %s110, %s27
      %s112 = smul.u32 %s44, 3
      %s113 = sadd.s32 %s112, %s40
      %s114 = sadd.s32 %s113, %s36
      %s115 = ssub.s32 %s111, %s114
      %p116 = scmp.eq.s32.totalorder %s115, 0
      %s118 = sadd.s32 %s117, 1
      %s119 = scalar_select %p116, %s117, %s118
      %p122 = pneg %p116
      %p123 = scmp.eq.s32.totalorder %s18, 5
      %p124 = por %p122, %p123
      %p125 = scmp.ne.s32.totalorder %s117, %s120
      %p126 = scmp.eq.s32.totalorder %s18, 0
      %p127 = por %p125, %p126
      %p128 = scmp.ne.s32.totalorder %s117, %s120
      %p129 = scmp.eq.s32.totalorder %s23, 5
      %p130 = por %p128, %p129
      %p131 = scmp.ne.s32.totalorder %s120, %s121
      %p132 = scmp.eq.s32.totalorder %s23, 0
      %p133 = por %p131, %p132
      %p134 = scmp.ne.s32.totalorder %s120, %s121
      %p135 = scmp.eq.s32.totalorder %s24, 5
      %p136 = por %p134, %p135
      %p138 = scmp.ne.s32.totalorder %s121, %s137
      %p139 = scmp.eq.s32.totalorder %s24, 0
      %p140 = por %p138, %p139
      %s141 = smul.u32 %s25, 3
      %s142 = sadd.s32 %s141, %s26
      %s143 = sadd.s32 %s142, %s27
      %s144 = smul.u32 %s44, 3
      %s145 = sadd.s32 %s144, %s40
      %s146 = sadd.s32 %s145, %s36
      %s147 = ssub.s32 %s143, %s146
      %p148 = scmp.eq.s32.totalorder %s147, 0
      %s150 = sadd.s32 %s149, 1
      %s151 = scalar_select %p148, %s149, %s150
      %p154 = pneg %p148
      %p155 = scmp.eq.s32.totalorder %s18, 5
      %p156 = por %p154, %p155
      %p157 = scmp.ne.s32.totalorder %s149, %s152
      %p158 = scmp.eq.s32.totalorder %s18, 0
      %p159 = por %p157, %p158
      %p160 = scmp.ne.s32.totalorder %s149, %s152
      %p161 = scmp.eq.s32.totalorder %s23, 5
      %p162 = por %p160, %p161
      %p163 = scmp.ne.s32.totalorder %s152, %s153
      %p164 = scmp.eq.s32.totalorder %s23, 0
      %p165 = por %p163, %p164
      %p166 = scmp.ne.s32.totalorder %s152, %s153
      %p167 = scmp.eq.s32.totalorder %s24, 5
      %p168 = por %p166, %p167
      %p170 = scmp.ne.s32.totalorder %s153, %s169
      %p171 = scmp.eq.s32.totalorder %s24, 0
      %p172 = por %p170, %p171
      %s173 = smul.u32 %s25, 3
      %s174 = sadd.s32 %s173, %s26
      %s175 = sadd.s32 %s174, %s27
      %s176 = smul.u32 %s44, 3
      %s177 = sadd.s32 %s176, %s40
      %s178 = sadd.s32 %s177, %s36
      %s179 = ssub.s32 %s175, %s178
      %p180 = scmp.eq.s32.totalorder %s179, 0
      %s182 = sadd.s32 %s181, 1
      %s183 = scalar_select %p180, %s181, %s182
      %p186 = pneg %p180
      %p187 = scmp.eq.s32.totalorder %s18, 5
      %p188 = por %p186, %p187
      %p189 = scmp.ne.s32.totalorder %s181, %s184
      %p190 = scmp.eq.s32.totalorder %s18, 0
      %p191 = por %p189, %p190
      %p192 = scmp.ne.s32.totalorder %s181, %s184
      %p193 = scmp.eq.s32.totalorder %s23, 5
      %p194 = por %p192, %p193
      %p195 = scmp.ne.s32.totalorder %s184, %s185
      %p196 = scmp.eq.s32.totalorder %s23, 0
      %p197 = por %p195, %p196
      %p198 = scmp.ne.s32.totalorder %s184, %s185
      %p199 = scmp.eq.s32.totalorder %s24, 5
      %p200 = por %p198, %p199
      %p202 = scmp.ne.s32.totalorder %s185, %s201
      %p203 = scmp.eq.s32.totalorder %s24, 0
      %p204 = por %p202, %p203
      %s205 = smul.u32 %s25, 3
      %s206 = sadd.s32 %s205, %s26
      %s207 = sadd.s32 %s206, %s27
      %s208 = smul.u32 %s44, 3
      %s209 = sadd.s32 %s208, %s40
      %s210 = sadd.s32 %s209, %s36
      %s211 = ssub.s32 %s207, %s210
      %p212 = scmp.eq.s32.totalorder %s211, 0
      %s214 = sadd.s32 %s213, 1
      %s215 = scalar_select %p212, %s213, %s214
      %p218 = pneg %p212
      %p219 = scmp.eq.s32.totalorder %s18, 5
      %p220 = por %p218, %p219
      %p221 = scmp.ne.s32.totalorder %s213, %s216
      %p222 = scmp.eq.s32.totalorder %s18, 0
      %p223 = por %p221, %p222
      %p224 = scmp.ne.s32.totalorder %s213, %s216
      %p225 = scmp.eq.s32.totalorder %s23, 5
      %p226 = por %p224, %p225
      %p227 = scmp.ne.s32.totalorder %s216, %s217
      %p228 = scmp.eq.s32.totalorder %s23, 0
      %p229 = por %p227, %p228
      %p230 = scmp.ne.s32.totalorder %s216, %s217
      %p231 = scmp.eq.s32.totalorder %s24, 5
      %p232 = por %p230, %p231
      %p234 = scmp.ne.s32.totalorder %s217, %s233
      %p235 = scmp.eq.s32.totalorder %s24, 0
      %p236 = por %p234, %p235
      %p237 = scmp.le.s32.totalorder 1, %s18
      %p238 = scmp.lt.s32.totalorder %s18, 7
      %p239 = pnand %p237, %p238
      %p240 = pneg %p239
      // Predicated region
      $region9: #{tpu_custom_call.1} parent=5 // pred_check
        _
      $region10: #{tpu_custom_call.1} parent=5 // pred_check_branch
        %242 = sbr.rel (%p239) target = $region12
      $region11: #{tpu_custom_call.1} parent=5 // pred_region
        %s243 = ssub.s32 %s18, 1
      $region12: #{tpu_custom_call.1} parent=5 // pred_fallthru
        _
      %p244 = scmp.lt.s32.totalorder %s18, 6
      // Predicated region
      $region13: #{tpu_custom_call.1} parent=5 // pred_check
        %p245 = pneg %p244
      $region14: #{tpu_custom_call.1} parent=5 // pred_check_branch
        %247 = sbr.rel (%p245) target = $region16
      $region15: #{tpu_custom_call.1} parent=5 // pred_region
        // Predicated region
        $region17: #{tpu_custom_call.1} parent=15 // pred_check
          %p248 = pneg %p63
        $region18: #{tpu_custom_call.1} parent=15 // pred_check_branch
          %250 = sbr.rel (%p248) target = $region20
        $region19: #{tpu_custom_call.1} parent=15 // pred_region
          %s251 = sand.u32 %s53, 1
          %s252 = scalar_lea.sflag [#allocation3], %s251
          %s253 = sand.u32 %s53, 1
          %s254 = smul.addr %s253, 8
          %s255 = scalar_lea.vmem [#allocation2], %s254
          %s256 = smul.u32 %s25, 3
          %s257 = sadd.s32 %s256, %s26
          %s258 = sadd.s32 %s257, %s27
          %s260 = ssub.s32 128, 128
          %261 = vsyncadd %s252, %s260
          %s262 = smul.addr %s258, 128
          %s263 = scalar_lea.hbm %s0, %s262
          %s265 = sshll.u32 %s255, 4
          %s266 = int_to_ptr.vmem [resolvable:$true] %s265
          %268 = dma.hbm_to_vmem [thread:$0]  %s263, 128, %s266, %s252
        $region20: #{tpu_custom_call.1} parent=15 // pred_fallthru
          _
        // Predicated region
        $region21: #{tpu_custom_call.1} parent=15 // pred_check
          %p269 = pneg %p95
        $region22: #{tpu_custom_call.1} parent=15 // pred_check_branch
          %271 = sbr.rel (%p269) target = $region24
        $region23: #{tpu_custom_call.1} parent=15 // pred_region
          %s272 = sand.u32 %s85, 1
          %s273 = scalar_lea.sflag [#allocation5], %s272
          %s274 = sand.u32 %s85, 1
          %s275 = smul.addr %s274, 8
          %s276 = scalar_lea.vmem [#allocation4], %s275
          %s277 = smul.u32 %s25, 3
          %s278 = sadd.s32 %s277, %s26
          %s279 = sadd.s32 %s278, %s27
          %s281 = ssub.s32 128, 128
          %282 = vsyncadd %s273, %s281
          %s283 = smul.addr %s279, 128
          %s284 = scalar_lea.hbm %s1, %s283
          %s286 = sshll.u32 %s276, 4
          %s287 = int_to_ptr.vmem [resolvable:$true] %s286
          %289 = dma.hbm_to_vmem [thread:$0]  %s284, 128, %s287, %s273
        $region24: #{tpu_custom_call.1} parent=15 // pred_fallthru
          _
      $region16: #{tpu_custom_call.1} parent=5 // pred_fallthru
        _
      %p290 = scmp.le.s32.totalorder 1, %s18
      %p291 = scmp.lt.s32.totalorder %s18, 7
      %p292 = pnand %p290, %p291
      %p293 = pneg %p292
      // Predicated region
      $region25: #{tpu_custom_call.1} parent=5 // pred_check
        _
      $region26: #{tpu_custom_call.1} parent=5 // pred_check_branch
        %295 = sbr.rel (%p292) target = $region28
      $region27: #{tpu_custom_call.1} parent=5 // pred_region
        %s296 = ssub.s32 %s18, 1
        %s297 = sand.u32 %s56, 1
        %s298 = scalar_lea.sflag [#allocation3], %s297
        %s299 = sand.u32 %s56, 1
        %s300 = smul.addr %s299, 8
        %s301 = scalar_lea.vmem [#allocation2], %s300
        // Predicated region
        $region29: #{tpu_custom_call.1} parent=27 // pred_check
          %p302 = pneg %p69
        $region30: #{tpu_custom_call.1} parent=27 // pred_check_branch
          %304 = sbr.rel (%p302) target = $region32
        $region31: #{tpu_custom_call.1} parent=27 // pred_region
          %305 = dma.done %s298, 128
        $region32: #{tpu_custom_call.1} parent=27 // pred_fallthru
          _
        %s306 = sand.u32 %s88, 1
        %s307 = scalar_lea.sflag [#allocation5], %s306
        %s308 = sand.u32 %s88, 1
        %s309 = smul.addr %s308, 8
        %s310 = scalar_lea.vmem [#allocation4], %s309
        // Predicated region
        $region33: #{tpu_custom_call.1} parent=27 // pred_check
          %p311 = pneg %p101
        $region34: #{tpu_custom_call.1} parent=27 // pred_check_branch
          %313 = sbr.rel (%p311) target = $region36
        $region35: #{tpu_custom_call.1} parent=27 // pred_region
          %314 = dma.done %s307, 128
        $region36: #{tpu_custom_call.1} parent=27 // pred_fallthru
          _
        %s315 = sand.u32 %s56, 1
        %s316 = scalar_lea.sflag [#allocation3], %s315
        %s317 = sand.u32 %s56, 1
        %s318 = smul.addr %s317, 8
        %s319 = scalar_lea.vmem [#allocation2], %s318
        %p320 = pneg %p69
        %p321 = pneg %p66
        %s322 = sand.u32 %s88, 1
        %s323 = scalar_lea.sflag [#allocation5], %s322
        %s324 = sand.u32 %s88, 1
        %s325 = smul.addr %s324, 8
        %s326 = scalar_lea.vmem [#allocation4], %s325
        %p327 = pneg %p101
        %p328 = pneg %p98
        %p329 = pneg %p133
        %p330 = pneg %p130
        %s331 = smul.u32 %s28, 3
        %s332 = sadd.s32 %s331, %s29
        %s333 = sadd.s32 %s332, %s30
        %p334 = scmp.lt.s32.totalorder %s333, 5
        %s335 = scalar_select %p334, %s333, 5
        %s336 = scalar_lea.vmem %s2, %s335
        %p337 = pneg %p165
        %p338 = pneg %p162
        %s339 = smul.u32 %s28, 3
        %s340 = sadd.s32 %s339, %s29
        %s341 = sadd.s32 %s340, %s30
        %p342 = scmp.lt.s32.totalorder %s341, 5
        %s343 = scalar_select %p342, %s341, 5
        %s344 = scalar_lea.vmem %s3, %s343
        %p345 = pneg %p197
        %p346 = pneg %p194
        %s347 = smul.u32 %s28, 3
        %s348 = sadd.s32 %s347, %s29
        %s349 = sadd.s32 %s348, %s30
        %p350 = scmp.lt.s32.totalorder %s349, 5
        %s351 = scalar_select %p350, %s349, 5
        %s352 = scalar_lea.vmem %s4, %s351
        %p353 = pneg %p229
        %p354 = pneg %p226
        %s355 = smul.u32 %s28, 3
        %s356 = sadd.s32 %s355, %s29
        %s357 = sadd.s32 %s356, %s30
        %p358 = scmp.lt.s32.totalorder %s357, 5
        %s359 = scalar_select %p358, %s357, 5
        %s360 = scalar_lea.vmem %s5, %s359
        %s361 = smul.u32 %s28, 3
        %s362 = sadd.s32 %s361, %s29
        %s363 = sadd.s32 %s362, %s30
        %s364 = smul.u32 %s28, 3
        %s365 = sadd.s32 %s364, %s29
        %s366 = sadd.s32 %s365, %s30
        %s367 = smul.u32 %s28, 3
        %s368 = sadd.s32 %s367, %s29
        %s369 = sadd.s32 %s368, %s30
        %p370 = scmp.lt.s32.totalorder %s369, 5
        %s371 = scalar_select %p370, %s369, 5
        %s372 = scalar_lea.vmem %s2, %s371
        %s373 = smul.u32 %s28, 3
        %s374 = sadd.s32 %s373, %s29
        %s375 = sadd.s32 %s374, %s30
        %s376 = smul.u32 %s28, 3
        %s377 = sadd.s32 %s376, %s29
        %s378 = sadd.s32 %s377, %s30
        %p379 = scmp.lt.s32.totalorder %s378, 5
        %s380 = scalar_select %p379, %s378, 5
        %s381 = scalar_lea.vmem %s3, %s380
        %s382 = smul.u32 %s28, 3
        %s383 = sadd.s32 %s382, %s29
        %s384 = sadd.s32 %s383, %s30
        %s385 = smul.u32 %s28, 3
        %s386 = sadd.s32 %s385, %s29
        %s387 = sadd.s32 %s386, %s30
        %p388 = scmp.lt.s32.totalorder %s387, 5
        %s389 = scalar_select %p388, %s387, 5
        %s390 = scalar_lea.vmem %s4, %s389
        %s391 = smul.u32 %s28, 3
        %s392 = sadd.s32 %s391, %s29
        %s393 = sadd.s32 %s392, %s30
        %s394 = smul.u32 %s28, 3
        %s395 = sadd.s32 %s394, %s29
        %s396 = sadd.s32 %s395, %s30
        %p397 = scmp.lt.s32.totalorder %s396, 5
        %s398 = scalar_select %p397, %s396, 5
        %s399 = scalar_lea.vmem %s5, %s398
        %s400 = smul.u32 %s28, 3
        %s401 = sadd.s32 %s400, %s29
        %s402 = sadd.s32 %s401, %s30
        %v403 = vld [vmem:[%s301] sm:$0xff]
        %v404 = vld [vmem:[%s310] sm:$0xff]
        %v405 = vand.u32 2147483647, %v403
        %v406 = vsub.f32 0.0, %v405
        %v407 = vmul.f32 %v406, 1.442695
        %v408 = vpow.pop %v407
        %v409 = vadd.f32 %v408, 1.0
        %v410 = vrcp.pop %v409
        %v411 = vmul.f32 1.0, %v410
        %vm412 = vcmp.ge.f32.partialorder %v403, 0.0
        %v413 = vmul.f32 %v408, %v411
        %v414 = vsel %vm412, %v411, %v413
        %v415 = vmax.f32 %v403, 0.0
        %v416 = vmul.f32 %v403, %v404
        %v417 = vsub.f32 %v415, %v416
        %v418 = vadd.f32 %v408, 1.0
        %v419 = vlog2.pop %v418
        %v420 = vmul.f32 %v419, 0.6931472
        %v421 = vmul.f32 -0.5, %v408
        %v422 = vadd.f32 %v421, 1.0
        %v423 = vmul.f32 %v422, %v408
        %v424 = vand.u32 2147483647, %v408
        %vm425 = vcmp.lt.f32.partialorder %v424, 0.0004427343
        %v426 = vsel %vm425, %v423, %v420
        %v427 = vadd.f32 %v417, %v426
        %v428 = vmul.f32 %v414, %v404
        %429 = vadd.xlane.f32.xlu0 %v428
        %v430 = vpop.xlane.xlu0 %429
        %v431 = vrot.slane %v430, 4
        %v432 = vadd.f32 %v430, %v431
        %v433 = vrot.slane %v432, 2
        %v434 = vadd.f32 %v432, %v433
        %v435 = vrot.slane %v434, 1
        %v436 = vadd.f32 %v434, %v435
        %s437 = vtos %v436
        %v438 = vstv %s437
        %vm439 = vcmask 0
        %440 = vst.msk [vmem:[%s372] sm:$0x1] %vm439, %v438
        %441 = vadd.xlane.f32.xlu0 %v414
        %v442 = vpop.xlane.xlu0 %441
        %v443 = vrot.slane %v442, 4
        %v444 = vadd.f32 %v442, %v443
        %v445 = vrot.slane %v444, 2
        %v446 = vadd.f32 %v444, %v445
        %v447 = vrot.slane %v446, 1
        %v448 = vadd.f32 %v446, %v447
        %s449 = vtos %v448
        %v450 = vstv %s449
        %451 = vst.msk [vmem:[%s381] sm:$0x1] %vm439, %v450
        %452 = vadd.xlane.f32.xlu0 %v404
        %v453 = vpop.xlane.xlu0 %452
        %v454 = vrot.slane %v453, 4
        %v455 = vadd.f32 %v453, %v454
        %v456 = vrot.slane %v455, 2
        %v457 = vadd.f32 %v455, %v456
        %v458 = vrot.slane %v457, 1
        %v459 = vadd.f32 %v457, %v458
        %s460 = vtos %v459
        %v461 = vstv %s460
        %462 = vst.msk [vmem:[%s390] sm:$0x1] %vm439, %v461
        %463 = vadd.xlane.f32.xlu0 %v427
        %v464 = vpop.xlane.xlu0 %463
        %v465 = vrot.slane %v464, 4
        %v466 = vadd.f32 %v464, %v465
        %v467 = vrot.slane %v466, 2
        %v468 = vadd.f32 %v466, %v467
        %v469 = vrot.slane %v468, 1
        %v470 = vadd.f32 %v468, %v469
        %s471 = vtos %v470
        %v472 = vstv %s471
        %473 = vst.msk [vmem:[%s399] sm:$0x1] %vm439, %v472
        %s474 = smul.u32 %s28, 3
        %s475 = sadd.s32 %s474, %s29
        %s476 = sadd.s32 %s475, %s30
        %p477 = scmp.lt.s32.totalorder %s476, 5
        %s478 = scalar_select %p477, %s476, 5
        %s479 = scalar_lea.vmem %s2, %s478
        %s480 = smul.u32 %s28, 3
        %s481 = sadd.s32 %s480, %s29
        %s482 = sadd.s32 %s481, %s30
        %p483 = scmp.lt.s32.totalorder %s482, 5
        %s484 = scalar_select %p483, %s482, 5
        %s485 = scalar_lea.vmem %s3, %s484
        %s486 = smul.u32 %s28, 3
        %s487 = sadd.s32 %s486, %s29
        %s488 = sadd.s32 %s487, %s30
        %p489 = scmp.lt.s32.totalorder %s488, 5
        %s490 = scalar_select %p489, %s488, 5
        %s491 = scalar_lea.vmem %s4, %s490
        %s492 = smul.u32 %s28, 3
        %s493 = sadd.s32 %s492, %s29
        %s494 = sadd.s32 %s493, %s30
        %p495 = scmp.lt.s32.totalorder %s494, 5
        %s496 = scalar_select %p495, %s494, 5
        %s497 = scalar_lea.vmem %s5, %s496
        // Predicated region
        $region37: #{tpu_custom_call.1} parent=27 // pred_check
          %p498 = pneg %p130
        $region38: #{tpu_custom_call.1} parent=27 // pred_check_branch
          %500 = sbr.rel (%p498) target = $region40
        $region39: #{tpu_custom_call.1} parent=27 // pred_region
          %s501 = smul.u32 %s28, 3
          %s502 = sadd.s32 %s501, %s29
          %s503 = sadd.s32 %s502, %s30
        $region40: #{tpu_custom_call.1} parent=27 // pred_fallthru
          _
        // Predicated region
        $region41: #{tpu_custom_call.1} parent=27 // pred_check
          %p504 = pneg %p162
        $region42: #{tpu_custom_call.1} parent=27 // pred_check_branch
          %506 = sbr.rel (%p504) target = $region44
        $region43: #{tpu_custom_call.1} parent=27 // pred_region
          %s507 = smul.u32 %s28, 3
          %s508 = sadd.s32 %s507, %s29
          %s509 = sadd.s32 %s508, %s30
        $region44: #{tpu_custom_call.1} parent=27 // pred_fallthru
          _
        // Predicated region
        $region45: #{tpu_custom_call.1} parent=27 // pred_check
          %p510 = pneg %p194
        $region46: #{tpu_custom_call.1} parent=27 // pred_check_branch
          %512 = sbr.rel (%p510) target = $region48
        $region47: #{tpu_custom_call.1} parent=27 // pred_region
          %s513 = smul.u32 %s28, 3
          %s514 = sadd.s32 %s513, %s29
          %s515 = sadd.s32 %s514, %s30
        $region48: #{tpu_custom_call.1} parent=27 // pred_fallthru
          _
        // Predicated region
        $region49: #{tpu_custom_call.1} parent=27 // pred_check
          %p516 = pneg %p226
        $region50: #{tpu_custom_call.1} parent=27 // pred_check_branch
          %518 = sbr.rel (%p516) target = $region52
        $region51: #{tpu_custom_call.1} parent=27 // pred_region
          %s519 = smul.u32 %s28, 3
          %s520 = sadd.s32 %s519, %s29
          %s521 = sadd.s32 %s520, %s30
        $region52: #{tpu_custom_call.1} parent=27 // pred_fallthru
          _
      $region28: #{tpu_custom_call.1} parent=5 // pred_fallthru
        _
      %p522 = scmp.le.s32.totalorder 2, %s18
      // Predicated region
      $region53: #{tpu_custom_call.1} parent=5 // pred_check
        %p523 = pneg %p522
      $region54: #{tpu_custom_call.1} parent=5 // pred_check_branch
        %525 = sbr.rel (%p523) target = $region56
      $region55: #{tpu_custom_call.1} parent=5 // pred_region
        %s526 = ssub.s32 %s18, 2
        // Predicated region
        $region57: #{tpu_custom_call.1} parent=55 // pred_check
          %p527 = pneg %p136
        $region58: #{tpu_custom_call.1} parent=55 // pred_check_branch
          %529 = sbr.rel (%p527) target = $region60
        $region59: #{tpu_custom_call.1} parent=55 // pred_region
          %s530 = smul.u32 %s31, 3
          %s531 = sadd.s32 %s530, %s32
          %s532 = sadd.s32 %s531, %s33
          %p533 = scmp.lt.s32.totalorder %s532, 5
          %s534 = scalar_select %p533, %s532, 5
          %s535 = scalar_lea.vmem %s2, %s534
        $region60: #{tpu_custom_call.1} parent=55 // pred_fallthru
          _
        // Predicated region
        $region61: #{tpu_custom_call.1} parent=55 // pred_check
          %p536 = pneg %p168
        $region62: #{tpu_custom_call.1} parent=55 // pred_check_branch
          %538 = sbr.rel (%p536) target = $region64
        $region63: #{tpu_custom_call.1} parent=55 // pred_region
          %s539 = smul.u32 %s31, 3
          %s540 = sadd.s32 %s539, %s32
          %s541 = sadd.s32 %s540, %s33
          %p542 = scmp.lt.s32.totalorder %s541, 5
          %s543 = scalar_select %p542, %s541, 5
          %s544 = scalar_lea.vmem %s3, %s543
        $region64: #{tpu_custom_call.1} parent=55 // pred_fallthru
          _
        // Predicated region
        $region65: #{tpu_custom_call.1} parent=55 // pred_check
          %p545 = pneg %p200
        $region66: #{tpu_custom_call.1} parent=55 // pred_check_branch
          %547 = sbr.rel (%p545) target = $region68
        $region67: #{tpu_custom_call.1} parent=55 // pred_region
          %s548 = smul.u32 %s31, 3
          %s549 = sadd.s32 %s548, %s32
          %s550 = sadd.s32 %s549, %s33
          %p551 = scmp.lt.s32.totalorder %s550, 5
          %s552 = scalar_select %p551, %s550, 5
          %s553 = scalar_lea.vmem %s4, %s552
        $region68: #{tpu_custom_call.1} parent=55 // pred_fallthru
          _
        // Predicated region
        $region69: #{tpu_custom_call.1} parent=55 // pred_check
          %p554 = pneg %p232
        $region70: #{tpu_custom_call.1} parent=55 // pred_check_branch
          %556 = sbr.rel (%p554) target = $region72
        $region71: #{tpu_custom_call.1} parent=55 // pred_region
          %s557 = smul.u32 %s31, 3
          %s558 = sadd.s32 %s557, %s32
          %s559 = sadd.s32 %s558, %s33
          %p560 = scmp.lt.s32.totalorder %s559, 5
          %s561 = scalar_select %p560, %s559, 5
          %s562 = scalar_lea.vmem %s5, %s561
        $region72: #{tpu_custom_call.1} parent=55 // pred_fallthru
          _
      $region56: #{tpu_custom_call.1} parent=5 // pred_fallthru
        _
    $region6: #{tpu_custom_call.1} parent=1 // loop_footer
      %s22 = sadd.s32 1, %s18
    $region7: #{tpu_custom_call.1} parent=1 // loop_footer_branch
      %17 = sbr.rel target = $region3
    $region8: #{tpu_custom_call.1} parent=1 // loop_exit
      _
    %563 = vsyncpa [#allocation3], 1
    %s564 = scalar_lea.sflag [#allocation3], 1
    %565 = vsyncpa %s564, 1
    %566 = vsyncpa [#allocation5], 1
    %s567 = scalar_lea.sflag [#allocation5], 1
    %568 = vsyncpa %s567, 1

</llo_original>
